<compile_context>
chip_gen: v7x
topology: tpu7x:2x2x1
jax: 0.10.0
libtpu: 0.0.40
codegen_flags: <defaults>
</compile_context>

<pallas_src>
import functools

import numpy as np
import jax
import jax.numpy as jnp
from jax import lax
from jax.experimental import pallas as pl
from jax.experimental.pallas import tpu as pltpu

POS_MARGIN = 0.8
NEG_MARGIN = 0.3
TILE_MAX = 512       # gram tile rows/cols (feeds the 256x256 MXU, VMEM-safe on v7x)
LANE = 128           # feature dim padded lane-dense


def _round_up(x, m):
    return ((x + m - 1) // m) * m


def _get_pairs_cos_pos_neg(labels_np):
    """Vectorized stand-in for pair_selector.get_pairs(..., 'cos_pos_neg')."""
    # TODO(synk): plug in the real pair_selector if its semantics differ.
    n = int(labels_np.shape[0])
    iu, ju = np.triu_indices(n, k=1)
    same = labels_np[iu] == labels_np[ju]
    pos = np.stack([iu[same], ju[same]], axis=1).astype(np.int32).reshape(-1, 2)
    neg = np.stack([iu[~same], ju[~same]], axis=1).astype(np.int32).reshape(-1, 2)
    return pos, neg


def _gram_tri_kernel(pos_margin, neg_margin,
                     rblk_ref, cblk_ref,              # scalar-prefetch schedule (SMEM)
                     er_ref, et_ref, lr_ref, lc_ref,  # inputs
                     loss_ref, pos_ref, all_ref):     # per-step (1, tile) partial sums
    step = pl.program_id(0)
    r = rblk_ref[step]
    c = cblk_ref[step]

    # Cosine tile on the MXU: (tile, Dp) @ (Dp, tile); feature padding is zero.
    s = jnp.dot(er_ref[...], et_ref[...], preferred_element_type=jnp.float32)
    ispos = lr_ref[...] == lc_ref[...]                # (tile,1)==(1,tile) -> (tile,tile)

    def emit(valid):
        if valid is None:
            # Off-diagonal block: every (i, j) already satisfies i < j.  Padded
            # rows have unique sentinel labels -> negative branch with s == 0 ->
            # exact zero contribution everywhere, so no validity mask is needed.
            loss_t = jnp.where(ispos,
                               jnp.maximum(pos_margin - s, 0.0),
                               jnp.maximum(s - neg_margin, 0.0))
            pos_t = jnp.where(ispos, s, 0.0)
            all_t = s
        else:
            loss_t = jnp.where(valid,
                               jnp.where(ispos,
                                         jnp.maximum(pos_margin - s, 0.0),
                                         jnp.maximum(s - neg_margin, 0.0)),
                               0.0)
            pos_t = jnp.where(valid & ispos, s, 0.0)
            all_t = jnp.where(valid, s, 0.0)
        # Lane-dense per-step partials (sublane reduce only); the scalar collapse
        # and the mean divisions happen once, in XLA, after the kernel.
        loss_ref[...] = jnp.sum(loss_t, axis=0, keepdims=True)
        pos_ref[...] = jnp.sum(pos_t, axis=0, keepdims=True)
        all_ref[...] = jnp.sum(all_t, axis=0, keepdims=True)

    @pl.when(r == c)
    def _diag():
        tr, tc = s.shape
        li = lax.broadcasted_iota(jnp.int32, (tr, tc), 0)
        lj = lax.broadcasted_iota(jnp.int32, (tr, tc), 1)
        emit(li < lj)          # strict upper triangle (local indices suffice here)

    @pl.when(r != c)
    def _off_diag():
        emit(None)             # r < c by construction


def online_contrastive_cos_loss(embeddings, labels,
                                pos_margin=POS_MARGIN, neg_margin=NEG_MARGIN,
                                tile=None, use_bf16=False):
    """Forward pass of OnlineContrastiveCosLoss (pair selection = 'cos_pos_neg')."""
    labels_np = np.asarray(labels).astype(np.int32).reshape(-1)
    pos_np, neg_np = _get_pairs_cos_pos_neg(labels_np)
    positive_pairs = jnp.asarray(pos_np)
    negative_pairs = jnp.asarray(neg_np)
    P, N = int(pos_np.shape[0]), int(neg_np.shape[0])
    T = P + N

    B, D = embeddings.shape
    Dp = _round_up(max(D, 1), LANE)

    if tile is None:
        b8 = _round_up(B, 8)
        if b8 <= TILE_MAX:
            tile, Bp = b8, b8                      # single block covering the batch
        else:
            tile, Bp = TILE_MAX, _round_up(B, TILE_MAX)
    else:
        tile = int(tile)
        assert tile % 8 == 0, "tile must be a multiple of 8"
        Bp = _round_up(B, tile)
        assert tile % 128 == 0 or Bp == tile, \
            "tile must be a multiple of 128 unless it covers the whole padded batch"
    nb = Bp // tile

    # Upper-triangular block schedule, row-major so the row block stays resident
    # across consecutive grid steps (Pallas skips re-fetch on unchanged index).
    rblk_l, cblk_l = [], []
    for r in range(nb):
        for c in range(r, nb):
            rblk_l.append(r)
            cblk_l.append(c)
    num_steps = len(rblk_l)
    rblk = jnp.asarray(np.asarray(rblk_l, dtype=np.int32))
    cblk = jnp.asarray(np.asarray(cblk_l, dtype=np.int32))

    compute_dtype = jnp.bfloat16 if use_bf16 else jnp.float32
    e = jnp.pad(jnp.asarray(embeddings, jnp.float32), ((0, Bp - B), (0, Dp - D)))
    e = e.astype(compute_dtype)
    et = jnp.transpose(e)                          # (Dp, Bp) — transposed once, outside the kernel

    # Padded rows get unique sentinel labels (> all real labels, mutually distinct)
    # so they never form a "positive" pair and contribute exactly zero.
    pad = Bp - B
    if pad:
        base = (int(labels_np.max()) + 1) if B else 0
        lab_np = np.concatenate(
            [labels_np.astype(np.int64), base + np.arange(pad, dtype=np.int64)]
        ).astype(np.int32)
    else:
        lab_np = labels_np
    lab = jnp.asarray(lab_np, dtype=jnp.int32)
    lab_row = lab.reshape(Bp, 1)
    lab_col = lab.reshape(1, Bp)

    kernel = functools.partial(_gram_tri_kernel, float(pos_margin), float(neg_margin))
    part_shape = jax.ShapeDtypeStruct((num_steps, tile), jnp.float32)

    # Tile-derived scoped-VMEM request (floor at default-ish 32 MiB, cap well under
    # v7x's 64 MiB physical VMEM). Actual usage at tile<=512 is only a few MiB.
    bytes_el = 2 if use_bf16 else 4
    vmem_limit = int(min(48 << 20,
                         max(32 << 20,
                             8 * tile * tile * 4            # (tile,tile) f32 temporaries
                             + 2 * 2 * tile * Dp * bytes_el  # double-buffered E / E^T blocks
                             + 3 * 2 * tile * 4              # partial-sum output blocks
                             + (2 << 20))))

    loss_p, pos_p, all_p = pl.pallas_call(
        kernel,
        out_shape=(part_shape, part_shape, part_shape),
        grid_spec=pltpu.PrefetchScalarGridSpec(
            num_scalar_prefetch=2,
            grid=(num_steps,),
            in_specs=[
                pl.BlockSpec((tile, Dp), lambda s, rb, cb: (rb[s], 0)),   # E row block
                pl.BlockSpec((Dp, tile), lambda s, rb, cb: (0, cb[s])),   # E^T col block
                pl.BlockSpec((tile, 1), lambda s, rb, cb: (rb[s], 0)),    # row labels
                pl.BlockSpec((1, tile), lambda s, rb, cb: (0, cb[s])),    # col labels
            ],
            out_specs=(
                pl.BlockSpec((1, tile), lambda s, rb, cb: (s, 0)),
                pl.BlockSpec((1, tile), lambda s, rb, cb: (s, 0)),
                pl.BlockSpec((1, tile), lambda s, rb, cb: (s, 0)),
            ),
        ),
        compiler_params=pltpu.CompilerParams(
            dimension_semantics=("parallel",),   # per-step output blocks -> shards over v7x's 2 TCs
            vmem_limit_bytes=vmem_limit),
    )(rblk, cblk, e, et, lab_row, lab_col)

    loss_sum = jnp.sum(loss_p)
    pos_sum = jnp.sum(pos_p)
    neg_sum = jnp.sum(all_p) - pos_sum           # ncos derived from (valid - pos) sums
    # Division by a zero pair-count yields nan, matching torch.mean of an empty tensor.
    loss_mean = loss_sum / jnp.float32(T)
    pos_mean = pos_sum / jnp.float32(P)
    neg_mean = neg_sum / jnp.float32(N)

    # Same return structure as the PyTorch module's forward.
    return [loss_mean, pos_mean, neg_mean, [positive_pairs, negative_pairs], T]


def _reference(embeddings, pos_pairs, neg_pairs, pos_margin, neg_margin):
    pos_cos = jnp.sum(embeddings[pos_pairs[:, 0]] * embeddings[pos_pairs[:, 1]], axis=1)
    neg_cos = jnp.sum(embeddings[neg_pairs[:, 0]] * embeddings[neg_pairs[:, 1]], axis=1)
    positive_loss = jnp.maximum(pos_margin - pos_cos, 0.0)
    negative_loss = jnp.maximum(neg_cos - neg_margin, 0.0)
    loss = jnp.concatenate([positive_loss, negative_loss], axis=0)
    return loss.mean(), pos_cos.mean(), neg_cos.mean()


def _check(emb, labels_np, tile=None, use_bf16=False, rtol=1e-5, atol=1e-5):
    out = online_contrastive_cos_loss(emb, labels_np, tile=tile, use_bf16=use_bf16)
    jax.block_until_ready(out[0])
    pos_np, neg_np = _get_pairs_cos_pos_neg(np.asarray(labels_np).astype(np.int32))
    ref_loss, ref_pos, ref_neg = _reference(emb, jnp.asarray(pos_np), jnp.asarray(neg_np),
                                            POS_MARGIN, NEG_MARGIN)
    np.testing.assert_allclose(np.asarray(out[0]), np.asarray(ref_loss), rtol=rtol, atol=atol)
    np.testing.assert_allclose(np.asarray(out[1]), np.asarray(ref_pos), rtol=rtol, atol=atol)
    np.testing.assert_allclose(np.asarray(out[2]), np.asarray(ref_neg), rtol=rtol, atol=atol)
    assert out[4] == pos_np.shape[0] + neg_np.shape[0]
    return out


if __name__ == "__main__":
    key = jax.random.PRNGKey(0)

    # --- Small case matching the module's typical mini-batch (single gram block) ---
    B, D = 8, 32
    emb = jax.random.normal(key, (B, D), dtype=jnp.float32)
    emb = emb / jnp.linalg.norm(emb, axis=1, keepdims=True)   # dot == cosine
    labels = np.array([0, 0, 1, 1, 2, 2, 3, 3], dtype=np.int32)
    _check(emb, labels)

    # --- Multi-block case: 3x3 block grid -> 6 triangular steps; exercises the
    #     diagonal/off-diagonal split, scalar-prefetch schedule, row/feature
    #     padding (B=300 -> 384, D=48 -> 128) and sentinel labels. ---
    B2, D2 = 300, 48
    k1, _ = jax.random.split(key)
    emb2 = jax.random.normal(k1, (B2, D2), dtype=jnp.float32)
    emb2 = emb2 / jnp.linalg.norm(emb2, axis=1, keepdims=True)
    labels2 = np.asarray(np.random.RandomState(0).randint(0, 7, size=(B2,)), dtype=np.int32)
    _check(emb2, labels2, tile=128, rtol=1e-4, atol=1e-4)

    # --- Opt-in bf16 matmul operands (half the DMA bytes, native bf16 MXU);
    #     tolerance relaxed accordingly. ---
    _check(emb2, labels2, tile=128, use_bf16=True, rtol=3e-2, atol=3e-2)

    print("KERNEL_OK")
</pallas_src>

<mosaic_0001>
module attributes {stable_mosaic.version = 11 : i64} {
  func.func @_gram_tri_kernel(%arg0: i32, %arg1: memref<1xi32, #tpu.memory_space<smem>>, %arg2: memref<1xi32, #tpu.memory_space<smem>>, %arg3: memref<8x128xf32, #tpu.memory_space<vmem>>, %arg4: memref<128x8xf32, #tpu.memory_space<vmem>>, %arg5: memref<8x1xi32, #tpu.memory_space<vmem>>, %arg6: memref<1x8xi32, #tpu.memory_space<vmem>>, %arg7: memref<1x8xf32, #tpu.memory_space<vmem>>, %arg8: memref<1x8xf32, #tpu.memory_space<vmem>>, %arg9: memref<1x8xf32, #tpu.memory_space<vmem>>) attributes {dimension_semantics = [#tpu.dimension_semantics<parallel>], iteration_bounds = array<i64: 1>, scalar_prefetch = 2 : i64, scratch_operands = 0 : i64, tpu.core_type = #tpu.core_type<tc>, window_params = [{transform_indices = @transform_0, window_bounds = array<i64: 8, 128>}, {transform_indices = @transform_1, window_bounds = array<i64: 128, 8>}, {transform_indices = @transform_2, window_bounds = array<i64: 8, 1>}, {transform_indices = @transform_3, window_bounds = array<i64: 1, 8>}, {transform_indices = @transform_4, window_bounds = array<i64: 1, 8>}, {transform_indices = @transform_5, window_bounds = array<i64: 1, 8>}, {transform_indices = @transform_6, window_bounds = array<i64: 1, 8>}]} {
    %0 = arith.index_cast %arg0 : i32 to index
    %1 = memref.load %arg1[%0] : memref<1xi32, #tpu.memory_space<smem>>
    %2 = arith.index_cast %arg0 : i32 to index
    %3 = memref.load %arg2[%2] : memref<1xi32, #tpu.memory_space<smem>>
    %c0 = arith.constant 0 : index
    %c0_0 = arith.constant 0 : index
    %4 = vector.load %arg3[%c0, %c0_0] : memref<8x128xf32, #tpu.memory_space<vmem>>, vector<8x128xf32>
    %c0_1 = arith.constant 0 : index
    %c0_2 = arith.constant 0 : index
    %5 = vector.load %arg4[%c0_1, %c0_2] : memref<128x8xf32, #tpu.memory_space<vmem>>, vector<128x8xf32>
    %cst = arith.constant dense<0.000000e+00> : vector<8x8xf32>
    %6 = tpu.matmul %4, %5, %cst {dimension_numbers = #tpu.dot_dimension_numbers<[1], [0], [0], [1], [0, 0, 1, 1], [], []>} : vector<8x128xf32>, vector<128x8xf32>, vector<8x8xf32> -> vector<8x8xf32>
    %c0_3 = arith.constant 0 : index
    %c0_4 = arith.constant 0 : index
    %7 = vector.load %arg5[%c0_3, %c0_4] : memref<8x1xi32, #tpu.memory_space<vmem>>, vector<8x1xi32>
    %c0_5 = arith.constant 0 : index
    %c0_6 = arith.constant 0 : index
    %8 = vector.load %arg6[%c0_5, %c0_6] : memref<1x8xi32, #tpu.memory_space<vmem>>, vector<1x8xi32>
    %9 = vector.broadcast %7 : vector<8x1xi32> to vector<8x8xi32>
    %10 = vector.broadcast %8 : vector<1x8xi32> to vector<8x8xi32>
    %11 = arith.cmpi eq, %9, %10 : vector<8x8xi32>
    %12 = arith.cmpi eq, %1, %3 : i32
    %13 = arith.extui %12 : i1 to i32
    %c0_i32 = arith.constant 0 : i32
    %14 = arith.cmpi ne, %13, %c0_i32 : i32
    scf.if %14 {
      %18 = tpu.iota {dimensions = array<i32: 0>} : vector<8x8xi32>
      %19 = tpu.iota {dimensions = array<i32: 1>} : vector<8x8xi32>
      %20 = arith.cmpi slt, %18, %19 : vector<8x8xi32>
      %cst_8 = arith.constant 8.000000e-01 : f32
      %21 = vector.broadcast %cst_8 : f32 to vector<8x8xf32>
      %22 = arith.subf %21, %6 : vector<8x8xf32>
      %cst_9 = arith.constant 0.000000e+00 : f32
      %23 = vector.broadcast %cst_9 : f32 to vector<8x8xf32>
      %24 = arith.maximumf %22, %23 : vector<8x8xf32>
      %cst_10 = arith.constant 3.000000e-01 : f32
      %25 = vector.broadcast %cst_10 : f32 to vector<8x8xf32>
      %26 = arith.subf %6, %25 : vector<8x8xf32>
      %cst_11 = arith.constant 0.000000e+00 : f32
      %27 = vector.broadcast %cst_11 : f32 to vector<8x8xf32>
      %28 = arith.maximumf %26, %27 : vector<8x8xf32>
      %29 = arith.select %11, %24, %28 : vector<8x8xi1>, vector<8x8xf32>
      %cst_12 = arith.constant 0.000000e+00 : f32
      %30 = vector.broadcast %cst_12 : f32 to vector<8x8xf32>
      %31 = arith.select %20, %29, %30 : vector<8x8xi1>, vector<8x8xf32>
      %32 = arith.andi %20, %11 : vector<8x8xi1>
      %cst_13 = arith.constant 0.000000e+00 : f32
      %33 = vector.broadcast %cst_13 : f32 to vector<8x8xf32>
      %34 = arith.select %32, %6, %33 : vector<8x8xi1>, vector<8x8xf32>
      %cst_14 = arith.constant 0.000000e+00 : f32
      %35 = vector.broadcast %cst_14 : f32 to vector<8x8xf32>
      %36 = arith.select %20, %6, %35 : vector<8x8xi1>, vector<8x8xf32>
      %cst_15 = arith.constant dense<0.000000e+00> : vector<8xf32>
      %37 = vector.multi_reduction <add>, %31, %cst_15 [0] : vector<8x8xf32> to vector<8xf32>
      %38 = vector.shape_cast %37 : vector<8xf32> to vector<1x8xf32>
      %c0_16 = arith.constant 0 : index
      %c0_17 = arith.constant 0 : index
      %39 = vector.load %arg7[%c0_16, %c0_17] : memref<1x8xf32, #tpu.memory_space<vmem>>, vector<1x8xf32>
      tpu.vector_store %arg7[%c0_16, %c0_17], %38 {strides = array<i32>} : memref<1x8xf32, #tpu.memory_space<vmem>>, vector<1x8xf32>,
      %cst_18 = arith.constant dense<0.000000e+00> : vector<8xf32>
      %40 = vector.multi_reduction <add>, %34, %cst_18 [0] : vector<8x8xf32> to vector<8xf32>
      %41 = vector.shape_cast %40 : vector<8xf32> to vector<1x8xf32>
      %c0_19 = arith.constant 0 : index
      %c0_20 = arith.constant 0 : index
      %42 = vector.load %arg8[%c0_19, %c0_20] : memref<1x8xf32, #tpu.memory_space<vmem>>, vector<1x8xf32>
      tpu.vector_store %arg8[%c0_19, %c0_20], %41 {strides = array<i32>} : memref<1x8xf32, #tpu.memory_space<vmem>>, vector<1x8xf32>,
      %cst_21 = arith.constant dense<0.000000e+00> : vector<8xf32>
      %43 = vector.multi_reduction <add>, %36, %cst_21 [0] : vector<8x8xf32> to vector<8xf32>
      %44 = vector.shape_cast %43 : vector<8xf32> to vector<1x8xf32>
      %c0_22 = arith.constant 0 : index
      %c0_23 = arith.constant 0 : index
      %45 = vector.load %arg9[%c0_22, %c0_23] : memref<1x8xf32, #tpu.memory_space<vmem>>, vector<1x8xf32>
      tpu.vector_store %arg9[%c0_22, %c0_23], %44 {strides = array<i32>} : memref<1x8xf32, #tpu.memory_space<vmem>>, vector<1x8xf32>,
    } else {
    }
    %15 = arith.cmpi ne, %1, %3 : i32
    %16 = arith.extui %15 : i1 to i32
    %c0_i32_7 = arith.constant 0 : i32
    %17 = arith.cmpi ne, %16, %c0_i32_7 : i32
    scf.if %17 {
      %cst_8 = arith.constant 8.000000e-01 : f32
      %18 = vector.broadcast %cst_8 : f32 to vector<8x8xf32>
      %19 = arith.subf %18, %6 : vector<8x8xf32>
      %cst_9 = arith.constant 0.000000e+00 : f32
      %20 = vector.broadcast %cst_9 : f32 to vector<8x8xf32>
      %21 = arith.maximumf %19, %20 : vector<8x8xf32>
      %cst_10 = arith.constant 3.000000e-01 : f32
      %22 = vector.broadcast %cst_10 : f32 to vector<8x8xf32>
      %23 = arith.subf %6, %22 : vector<8x8xf32>
      %cst_11 = arith.constant 0.000000e+00 : f32
      %24 = vector.broadcast %cst_11 : f32 to vector<8x8xf32>
      %25 = arith.maximumf %23, %24 : vector<8x8xf32>
      %26 = arith.select %11, %21, %25 : vector<8x8xi1>, vector<8x8xf32>
      %cst_12 = arith.constant 0.000000e+00 : f32
      %27 = vector.broadcast %cst_12 : f32 to vector<8x8xf32>
      %28 = arith.select %11, %6, %27 : vector<8x8xi1>, vector<8x8xf32>
      %cst_13 = arith.constant dense<0.000000e+00> : vector<8xf32>
      %29 = vector.multi_reduction <add>, %26, %cst_13 [0] : vector<8x8xf32> to vector<8xf32>
      %30 = vector.shape_cast %29 : vector<8xf32> to vector<1x8xf32>
      %c0_14 = arith.constant 0 : index
      %c0_15 = arith.constant 0 : index
      %31 = vector.load %arg7[%c0_14, %c0_15] : memref<1x8xf32, #tpu.memory_space<vmem>>, vector<1x8xf32>
      tpu.vector_store %arg7[%c0_14, %c0_15], %30 {strides = array<i32>} : memref<1x8xf32, #tpu.memory_space<vmem>>, vector<1x8xf32>,
      %cst_16 = arith.constant dense<0.000000e+00> : vector<8xf32>
      %32 = vector.multi_reduction <add>, %28, %cst_16 [0] : vector<8x8xf32> to vector<8xf32>
      %33 = vector.shape_cast %32 : vector<8xf32> to vector<1x8xf32>
      %c0_17 = arith.constant 0 : index
      %c0_18 = arith.constant 0 : index
      %34 = vector.load %arg8[%c0_17, %c0_18] : memref<1x8xf32, #tpu.memory_space<vmem>>, vector<1x8xf32>
      tpu.vector_store %arg8[%c0_17, %c0_18], %33 {strides = array<i32>} : memref<1x8xf32, #tpu.memory_space<vmem>>, vector<1x8xf32>,
      %cst_19 = arith.constant dense<0.000000e+00> : vector<8xf32>
      %35 = vector.multi_reduction <add>, %6, %cst_19 [0] : vector<8x8xf32> to vector<8xf32>
      %36 = vector.shape_cast %35 : vector<8xf32> to vector<1x8xf32>
      %c0_20 = arith.constant 0 : index
      %c0_21 = arith.constant 0 : index
      %37 = vector.load %arg9[%c0_20, %c0_21] : memref<1x8xf32, #tpu.memory_space<vmem>>, vector<1x8xf32>
      tpu.vector_store %arg9[%c0_20, %c0_21], %36 {strides = array<i32>} : memref<1x8xf32, #tpu.memory_space<vmem>>, vector<1x8xf32>,
    } else {
    }
    return
  }
  func.func @transform_0(%arg0: i32, %arg1: memref<1xi32, #tpu.memory_space<smem>>, %arg2: memref<1xi32, #tpu.memory_space<smem>>) -> (i32, i32) {
    %0 = arith.index_cast %arg0 : i32 to index
    %1 = memref.load %arg1[%0] : memref<1xi32, #tpu.memory_space<smem>>
    %c0_i32 = arith.constant 0 : i32
    %c0_i32_0 = arith.constant 0 : i32
    return %1, %c0_i32 : i32, i32
  }
  func.func @transform_1(%arg0: i32, %arg1: memref<1xi32, #tpu.memory_space<smem>>, %arg2: memref<1xi32, #tpu.memory_space<smem>>) -> (i32, i32) {
    %0 = arith.index_cast %arg0 : i32 to index
    %1 = memref.load %arg2[%0] : memref<1xi32, #tpu.memory_space<smem>>
    %c0_i32 = arith.constant 0 : i32
    %c0_i32_0 = arith.constant 0 : i32
    return %c0_i32, %1 : i32, i32
  }
  func.func @transform_2(%arg0: i32, %arg1: memref<1xi32, #tpu.memory_space<smem>>, %arg2: memref<1xi32, #tpu.memory_space<smem>>) -> (i32, i32) {
    %0 = arith.index_cast %arg0 : i32 to index
    %1 = memref.load %arg1[%0] : memref<1xi32, #tpu.memory_space<smem>>
    %c0_i32 = arith.constant 0 : i32
    %c0_i32_0 = arith.constant 0 : i32
    return %1, %c0_i32 : i32, i32
  }
  func.func @transform_3(%arg0: i32, %arg1: memref<1xi32, #tpu.memory_space<smem>>, %arg2: memref<1xi32, #tpu.memory_space<smem>>) -> (i32, i32) {
    %0 = arith.index_cast %arg0 : i32 to index
    %1 = memref.load %arg2[%0] : memref<1xi32, #tpu.memory_space<smem>>
    %c0_i32 = arith.constant 0 : i32
    %c0_i32_0 = arith.constant 0 : i32
    return %c0_i32, %1 : i32, i32
  }
  func.func @transform_4(%arg0: i32, %arg1: memref<1xi32, #tpu.memory_space<smem>>, %arg2: memref<1xi32, #tpu.memory_space<smem>>) -> (i32, i32) {
    %c0_i32 = arith.constant 0 : i32
    %c0_i32_0 = arith.constant 0 : i32
    return %arg0, %c0_i32 : i32, i32
  }
  func.func @transform_5(%arg0: i32, %arg1: memref<1xi32, #tpu.memory_space<smem>>, %arg2: memref<1xi32, #tpu.memory_space<smem>>) -> (i32, i32) {
    %c0_i32 = arith.constant 0 : i32
    %c0_i32_0 = arith.constant 0 : i32
    return %arg0, %c0_i32 : i32, i32
  }
  func.func @transform_6(%arg0: i32, %arg1: memref<1xi32, #tpu.memory_space<smem>>, %arg2: memref<1xi32, #tpu.memory_space<smem>>) -> (i32, i32) {
    %c0_i32 = arith.constant 0 : i32
    %c0_i32_0 = arith.constant 0 : i32
    return %arg0, %c0_i32 : i32, i32
  }
}

</mosaic_0001>

<llo_original>
// kernel: tpu_custom_call.1
$region0: #{tpu_custom_call.1}
  #allocation0 [shape = 'u32[]', space=smem, size = 0x4, offset = 0x4, fixed_abs, tag = 'smem constant byte address 0x4 - core index']
  #allocation1 [shape = 'u32[144,128]{1,0:T(1,128)}', space=vmem, size = 0x12000, scoped, tag = 'internal scratch']
  #allocation2 [shape = 's32[1]{0}', space=sflag, size = 0x4, scoped, tag = 'scoped memory for tpu_custom_call.1']
  #allocation3 [shape = 's32[1]{0:T(128)S(6)}', space=smem, size = 0x200, scoped, tag = 'prefetched SMEM operand 0']
  #allocation4 [shape = 's32[1]{0:T(128)S(6)}', space=smem, size = 0x200, scoped, tag = 'prefetched SMEM operand 1']
  %s0 = inlined_call_operand.<no memory space> [shape: s32[1], index: 0, kind: input, shape index: {}]
  %s1 = inlined_call_operand.<no memory space> [shape: s32[1], index: 1, kind: input, shape index: {}]
  %s2 = inlined_call_operand.vmem [shape: f32[8,128], index: 2, kind: input, shape index: {}]
  %s3 = inlined_call_operand.vmem [shape: f32[128,8], index: 3, kind: input, shape index: {}]
  %s4 = inlined_call_operand.vmem [shape: s32[8,1], index: 4, kind: input, shape index: {}]
  %s5 = inlined_call_operand.vmem [shape: s32[1,8], index: 5, kind: input, shape index: {}]
  %s6 = inlined_call_operand.hbm [shape: f32[1,8], index: 6, kind: output, shape index: {0}]
  %s7 = inlined_call_operand.hbm [shape: f32[1,8], index: 7, kind: output, shape index: {1}]
  %s8 = inlined_call_operand.hbm [shape: f32[1,8], index: 8, kind: output, shape index: {2}]
  %9 = xla_tuple %s6, %s7, %s8
  %s10 = sld [smem:[#allocation0]]
  $region50: #{tpu_custom_call.1} parent=0
    _
  %s12 = ssub.s32 1, %s10
  %s13 = scalar_select 0, %s12, %s10
  %14 = sst [smem:[#allocation3]] %s0
  %15 = sst [smem:[#allocation4]] %s1
  $region1: #{tpu_custom_call.1} parent=0
    #allocation5 [shape = 'u8[512]{0}', space=vmem, size = 0x400, scoped, tag = 'output window, operand 0, single buffered']
    #allocation6 [shape = 's32[1]{0}', space=sflag, size = 0x4, scoped, tag = 'scoped memory for tpu_custom_call.1']
    #allocation7 [shape = 'u8[512]{0}', space=vmem, size = 0x400, scoped, tag = 'output window, operand 1, single buffered']
    #allocation8 [shape = 's32[1]{0}', space=sflag, size = 0x4, scoped, tag = 'scoped memory for tpu_custom_call.1']
    #allocation9 [shape = 'u8[512]{0}', space=vmem, size = 0x400, scoped, tag = 'output window, operand 2, single buffered']
    %16 = vsyncpa [#allocation6], 0
    %17 = vsyncpa [#allocation8], 0
    // Predicated region
    $region2: #{tpu_custom_call.1} parent=1 // pred_check
      _
    $region3: #{tpu_custom_call.1} parent=1 // pred_check_branch
      %19 = sbr.rel (0) target = $region5
    $region4: #{tpu_custom_call.1} parent=1 // pred_region
      %s20 = sld [smem:[#allocation3]]
      %p21 = scmp.lt.s32.totalorder %s20, 0
      %s22 = scalar_select %p21, %s20, 0
      %s23 = smul.addr %s22, 8
      %s24 = scalar_lea.vmem %s2, %s23
      %s25 = sld [smem:[#allocation3]]
    $region5: #{tpu_custom_call.1} parent=1 // pred_fallthru
      _
    // Predicated region
    $region6: #{tpu_custom_call.1} parent=1 // pred_check
      _
    $region7: #{tpu_custom_call.1} parent=1 // pred_check_branch
      %27 = sbr.rel (0) target = $region9
    $region8: #{tpu_custom_call.1} parent=1 // pred_region
      %s28 = sld [smem:[#allocation4]]
      %p29 = scmp.lt.s32.totalorder %s28, 0
      %s30 = scalar_select %p29, %s28, 0
      %s31 = smul.addr %s30, 8
      %s32 = scalar_lea.vmem %s3, %s31
      %s33 = sld [smem:[#allocation4]]
    $region9: #{tpu_custom_call.1} parent=1 // pred_fallthru
      _
    // Predicated region
    $region10: #{tpu_custom_call.1} parent=1 // pred_check
      _
    $region11: #{tpu_custom_call.1} parent=1 // pred_check_branch
      %35 = sbr.rel (0) target = $region13
    $region12: #{tpu_custom_call.1} parent=1 // pred_region
      %s36 = sld [smem:[#allocation3]]
      %p37 = scmp.lt.s32.totalorder %s36, 0
      %s38 = scalar_select %p37, %s36, 0
      %s39 = smul.addr %s38, 8
      %s40 = scalar_lea.vmem %s4, %s39
      %s41 = sld [smem:[#allocation3]]
    $region13: #{tpu_custom_call.1} parent=1 // pred_fallthru
      _
    // Predicated region
    $region14: #{tpu_custom_call.1} parent=1 // pred_check
      _
    $region15: #{tpu_custom_call.1} parent=1 // pred_check_branch
      %43 = sbr.rel (0) target = $region17
    $region16: #{tpu_custom_call.1} parent=1 // pred_region
      %s44 = sld [smem:[#allocation4]]
      %p45 = scmp.lt.s32.totalorder %s44, 0
      %s46 = scalar_select %p45, %s44, 0
      %s47 = scalar_lea.vmem %s5, %s46
      %s48 = sld [smem:[#allocation4]]
    $region17: #{tpu_custom_call.1} parent=1 // pred_fallthru
      _
    %s49 = sld [smem:[#allocation3]]
    %p50 = scmp.lt.s32.totalorder %s49, 0
    %s51 = scalar_select %p50, %s49, 0
    %s52 = smul.addr %s51, 8
    %s53 = scalar_lea.vmem %s2, %s52
    %s54 = sld [smem:[#allocation4]]
    %p55 = scmp.lt.s32.totalorder %s54, 0
    %s56 = scalar_select %p55, %s54, 0
    %s57 = smul.addr %s56, 8
    %s58 = scalar_lea.vmem %s3, %s57
    %s59 = sld [smem:[#allocation3]]
    %p60 = scmp.lt.s32.totalorder %s59, 0
    %s61 = scalar_select %p60, %s59, 0
    %s62 = smul.addr %s61, 8
    %s63 = scalar_lea.vmem %s4, %s62
    %s64 = sld [smem:[#allocation4]]
    %p65 = scmp.lt.s32.totalorder %s64, 0
    %s66 = scalar_select %p65, %s64, 0
    %s67 = scalar_lea.vmem %s5, %s66
    %s68 = sld [smem:[#allocation3]]
    %p69 = scmp.lt.s32.totalorder %s68, 0
    %s70 = scalar_select %p69, %s68, 0
    %s71 = smul.addr %s70, 8
    %s72 = scalar_lea.vmem %s2, %s71
    %s73 = sld [smem:[#allocation3]]
    %s74 = sld [smem:[#allocation4]]
    %p75 = scmp.lt.s32.totalorder %s74, 0
    %s76 = scalar_select %p75, %s74, 0
    %s77 = smul.addr %s76, 8
    %s78 = scalar_lea.vmem %s3, %s77
    %s79 = sld [smem:[#allocation4]]
    %s80 = sld [smem:[#allocation3]]
    %p81 = scmp.lt.s32.totalorder %s80, 0
    %s82 = scalar_select %p81, %s80, 0
    %s83 = smul.addr %s82, 8
    %s84 = scalar_lea.vmem %s4, %s83
    %s85 = sld [smem:[#allocation3]]
    %s86 = sld [smem:[#allocation4]]
    %p87 = scmp.lt.s32.totalorder %s86, 0
    %s88 = scalar_select %p87, %s86, 0
    %s89 = scalar_lea.vmem %s5, %s88
    %s90 = sld [smem:[#allocation4]]
    %s91 = sld [smem:[#allocation3]]
    %s92 = sld [smem:[#allocation4]]
    %v93 = vld [vmem:[%s72] sm:$0xff]
    %v94 = vld [vmem:[%s78] sm:$0xff]
    %v95 = vld [vmem:[%s78 + $0x8] sm:$0xff]
    %v96 = vld [vmem:[%s78 + $0x10] sm:$0xff]
    %v97 = vld [vmem:[%s78 + $0x18] sm:$0xff]
    %v98 = vld [vmem:[%s78 + $0x20] sm:$0xff]
    %v99 = vld [vmem:[%s78 + $0x28] sm:$0xff]
    %v100 = vld [vmem:[%s78 + $0x30] sm:$0xff]
    %v101 = vld [vmem:[%s78 + $0x38] sm:$0xff]
    %v102 = vld [vmem:[%s78 + $0x40] sm:$0xff]
    %v103 = vld [vmem:[%s78 + $0x48] sm:$0xff]
    %v104 = vld [vmem:[%s78 + $0x50] sm:$0xff]
    %v105 = vld [vmem:[%s78 + $0x58] sm:$0xff]
    %v106 = vld [vmem:[%s78 + $0x60] sm:$0xff]
    %v107 = vld [vmem:[%s78 + $0x68] sm:$0xff]
    %v108 = vld [vmem:[%s78 + $0x70] sm:$0xff]
    %v109 = vld [vmem:[%s78 + $0x78] sm:$0xff]
    %110 = vmatprep.subr.mxu0 0.0
    %111 = vmatpush1.msra.mxu0 %v94
    %112 = vmatprep.subr.mxu0 0.0
    %113 = vmatpush1.msra.mxu0 %v95
    %114 = vmatprep.subr.mxu0 0.0
    %115 = vmatpush1.msra.mxu0 %v96
    %116 = vmatprep.subr.mxu0 0.0
    %117 = vmatpush1.msra.mxu0 %v97
    %118 = vmatprep.subr.mxu0 0.0
    %119 = vmatpush1.msra.mxu0 %v98
    %120 = vmatprep.subr.mxu0 0.0
    %121 = vmatpush1.msra.mxu0 %v99
    %122 = vmatprep.subr.mxu0 0.0
    %123 = vmatpush1.msra.mxu0 %v100
    %124 = vmatprep.subr.mxu0 0.0
    %125 = vmatpush1.msra.mxu0 %v101
    %126 = vmatprep.subr.mxu0 0.0
    %127 = vmatpush1.msra.mxu0 %v102
    %128 = vmatprep.subr.mxu0 0.0
    %129 = vmatpush1.msra.mxu0 %v103
    %130 = vmatprep.subr.mxu0 0.0
    %131 = vmatpush1.msra.mxu0 %v104
    %132 = vmatprep.subr.mxu0 0.0
    %133 = vmatpush1.msra.mxu0 %v105
    %134 = vmatprep.subr.mxu0 0.0
    %135 = vmatpush1.msra.mxu0 %v106
    %136 = vmatprep.subr.mxu0 0.0
    %137 = vmatpush1.msra.mxu0 %v107
    %138 = vmatprep.subr.mxu0 0.0
    %139 = vmatpush1.msra.mxu0 %v108
    %140 = vmatprep.subr.mxu0 0.0
    %141 = vmatpush1.msra.mxu0 %v109
    %142 = vmatprep.subr.mxu0 0.0
    %143 = vmatpush1.msra.mxu0 0.0
    %144 = vmatprep.subr.mxu0 0.0
    %145 = vmatpush1.msra.mxu0 0.0
    %146 = vmatprep.subr.mxu0 0.0
    %147 = vmatpush1.msra.mxu0 0.0
    %148 = vmatprep.subr.mxu0 0.0
    %149 = vmatpush1.msra.mxu0 0.0
    %150 = vmatprep.subr.mxu0 0.0
    %151 = vmatpush1.msra.mxu0 0.0
    %152 = vmatprep.subr.mxu0 0.0
    %153 = vmatpush1.msra.mxu0 0.0
    %154 = vmatprep.subr.mxu0 0.0
    %155 = vmatpush1.msra.mxu0 0.0
    %156 = vmatprep.subr.mxu0 0.0
    %157 = vmatpush1.msra.mxu0 0.0
    %158 = vmatprep.subr.mxu0 0.0
    %159 = vmatpush1.msra.mxu0 0.0
    %160 = vmatprep.subr.mxu0 0.0
    %161 = vmatpush1.msra.mxu0 0.0
    %162 = vmatprep.subr.mxu0 0.0
    %163 = vmatpush1.msra.mxu0 0.0
    %164 = vmatprep.subr.mxu0 0.0
    %165 = vmatpush1.msra.mxu0 0.0
    %166 = vmatprep.subr.mxu0 0.0
    %167 = vmatpush1.msra.mxu0 0.0
    %168 = vmatprep.subr.mxu0 0.0
    %169 = vmatpush1.msra.mxu0 0.0
    %170 = vmatprep.subr.mxu0 0.0
    %171 = vmatpush1.msra.mxu0 0.0
    %172 = vmatprep.subr.mxu0 0.0
    %173 = vmatpush1.msra.mxu0 0.0
    %174 = vmatprep.mubr.f32.mxu0 0.0
    %175 = vmatmul.mubr.f32.gmra.mrb[0].mxu0 %v93
    %v176 = vpop.f32.mrb[0].mxu0
    %v177 = vadd.f32 0.0, %v176
    %v178 = vpop.f32.mrb[0].mxu0
    %179 = vdwg.mxu0
    %v180 = vld [vmem:[%s84] sm:$0xff]
    %v181 = vld [vmem:[%s89] sm:$0x1]
    %182 = vset.pattern.permute.xlu0 0
    %183 = vperm.xlu0 %182, %v180
    %v184 = vpop.permute.xlu0 %183
    %v185 = vlaneseq
    %v186 = vshrl.u32 %v185, 7
    %v187 = vsub.s32 0, %v186
    %v188 = vrot.slane %v181, %v187
    %vm189 = vcmp.eq.s32.totalorder %v184, %v188
    %p190 = scmp.eq.s32.totalorder %s91, %s92
    // Predicated region
    $region18: #{tpu_custom_call.1} parent=1 // pred_check
      %p191 = pneg %p190
    $region19: #{tpu_custom_call.1} parent=1 // pred_check_branch
      %193 = sbr.rel (%p191) target = $region21
    $region20: #{tpu_custom_call.1} parent=1 // pred_region
      %v194 = vlaneseq
      %v195 = vshrl.u32 %v194, 7
      %v196 = vlaneseq
      %v197 = vand.u32 %v196, 127
      %vm198 = vcmp.lt.s32.totalorder %v195, %v197
      %v199 = vsub.f32 0.8, %v177
      %v200 = vmax.f32 %v199, 0.0
      %v201 = vsub.f32 %v177, 0.3
      %v202 = vmax.f32 %v201, 0.0
      %v203 = vsel %vm189, %v200, %v202
      %v204 = vsel %vm198, %v203, 0.0
      %vm205 = vmand %vm198, %vm189
      %v206 = vsel %vm205, %v177, 0.0
      %v207 = vsel %vm198, %v177, 0.0
      %vm208 = vcmask 64512
      %v209 = vsel %vm208, %v204, 0.0
      %v210 = vrot.slane %v209, 4
      %v211 = vadd.f32 %v209, %v210
      %v212 = vrot.slane %v211, 2
      %v213 = vadd.f32 %v211, %v212
      %v214 = vrot.slane %v213, 1
      %v215 = vadd.f32 %v213, %v214
      %vm216 = vcmask 57344
      %217 = vst.msk [vmem:[#allocation5] sm:$0x1] %vm216, %v215
      %v218 = vsel %vm208, %v206, 0.0
      %v219 = vrot.slane %v218, 4
      %v220 = vadd.f32 %v218, %v219
      %v221 = vrot.slane %v220, 2
      %v222 = vadd.f32 %v220, %v221
      %v223 = vrot.slane %v222, 1
      %v224 = vadd.f32 %v222, %v223
      %225 = vst.msk [vmem:[#allocation7] sm:$0x1] %vm216, %v224
      %v226 = vsel %vm208, %v207, 0.0
      %v227 = vrot.slane %v226, 4
      %v228 = vadd.f32 %v226, %v227
      %v229 = vrot.slane %v228, 2
      %v230 = vadd.f32 %v228, %v229
      %v231 = vrot.slane %v230, 1
      %v232 = vadd.f32 %v230, %v231
      %233 = vst.msk [vmem:[#allocation9] sm:$0x1] %vm216, %v232
    $region21: #{tpu_custom_call.1} parent=1 // pred_fallthru
      _
    %p234 = scmp.ne.s32.totalorder %s91, %s92
    // Predicated region
    $region22: #{tpu_custom_call.1} parent=1 // pred_check
      %p235 = pneg %p234
    $region23: #{tpu_custom_call.1} parent=1 // pred_check_branch
      %237 = sbr.rel (%p235) target = $region25
    $region24: #{tpu_custom_call.1} parent=1 // pred_region
      %v238 = vsub.f32 0.8, %v177
      %v239 = vmax.f32 %v238, 0.0
      %v240 = vsub.f32 %v177, 0.3
      %v241 = vmax.f32 %v240, 0.0
      %v242 = vsel %vm189, %v239, %v241
      %v243 = vsel %vm189, %v177, 0.0
      %vm244 = vcmask 64512
      %v245 = vsel %vm244, %v242, 0.0
      %v246 = vrot.slane %v245, 4
      %v247 = vadd.f32 %v245, %v246
      %v248 = vrot.slane %v247, 2
      %v249 = vadd.f32 %v247, %v248
      %v250 = vrot.slane %v249, 1
      %v251 = vadd.f32 %v249, %v250
      %vm252 = vcmask 57344
      %253 = vst.msk [vmem:[#allocation5] sm:$0x1] %vm252, %v251
      %v254 = vsel %vm244, %v243, 0.0
      %v255 = vrot.slane %v254, 4
      %v256 = vadd.f32 %v254, %v255
      %v257 = vrot.slane %v256, 2
      %v258 = vadd.f32 %v256, %v257
      %v259 = vrot.slane %v258, 1
      %v260 = vadd.f32 %v258, %v259
      %261 = vst.msk [vmem:[#allocation7] sm:$0x1] %vm252, %v260
      %v262 = vsel %vm244, %v177, 0.0
      %v263 = vrot.slane %v262, 4
      %v264 = vadd.f32 %v262, %v263
      %v265 = vrot.slane %v264, 2
      %v266 = vadd.f32 %v264, %v265
      %v267 = vrot.slane %v266, 1
      %v268 = vadd.f32 %v266, %v267
      %269 = vst.msk [vmem:[#allocation9] sm:$0x1] %vm252, %v268
    $region25: #{tpu_custom_call.1} parent=1 // pred_fallthru
      _
    // Predicated region
    $region26: #{tpu_custom_call.1} parent=1 // pred_check
      _
    $region27: #{tpu_custom_call.1} parent=1 // pred_check_branch
      %271 = sbr.rel (0) target = $region29
    $region28: #{tpu_custom_call.1} parent=1 // pred_region
      %s273 = ssub.s32 16, 16
      %274 = vsyncadd [#allocation6], %s273
      %s276 = sshll.u32 [#allocation5], 4
      %s277 = int_to_ptr.vmem [resolvable:$true] %s276
      %279 = dma.vmem_to_hbm [thread:$0]  %s277, 16, %s6, [#allocation6]
    $region29: #{tpu_custom_call.1} parent=1 // pred_fallthru
      _
    // Predicated region
    $region30: #{tpu_custom_call.1} parent=1 // pred_check
      _
    $region31: #{tpu_custom_call.1} parent=1 // pred_check_branch
      %281 = sbr.rel (0) target = $region33
    $region32: #{tpu_custom_call.1} parent=1 // pred_region
      %s283 = ssub.s32 16, 16
      %284 = vsyncadd [#allocation8], %s283
      %s286 = sshll.u32 [#allocation7], 4
      %s287 = int_to_ptr.vmem [resolvable:$true] %s286
      %289 = dma.vmem_to_hbm [thread:$0]  %s287, 16, %s7, [#allocation8]
    $region33: #{tpu_custom_call.1} parent=1 // pred_fallthru
      _
    // Predicated region
    $region34: #{tpu_custom_call.1} parent=1 // pred_check
      _
    $region35: #{tpu_custom_call.1} parent=1 // pred_check_branch
      %291 = sbr.rel (0) target = $region37
    $region36: #{tpu_custom_call.1} parent=1 // pred_region
      %s293 = ssub.s32 16, 16
      %294 = vsyncadd [#allocation8], %s293
      %s296 = sshll.u32 [#allocation9], 4
      %s297 = int_to_ptr.vmem [resolvable:$true] %s296
      %299 = dma.vmem_to_hbm [thread:$0]  %s297, 16, %s8, [#allocation8]
    $region37: #{tpu_custom_call.1} parent=1 // pred_fallthru
      _
    // Predicated region
    $region38: #{tpu_custom_call.1} parent=1 // pred_check
      _
    $region39: #{tpu_custom_call.1} parent=1 // pred_check_branch
      %301 = sbr.rel (0) target = $region41
    $region40: #{tpu_custom_call.1} parent=1 // pred_region
      %302 = dma.done [#allocation6], 16
    $region41: #{tpu_custom_call.1} parent=1 // pred_fallthru
      _
    // Predicated region
    $region42: #{tpu_custom_call.1} parent=1 // pred_check
      _
    $region43: #{tpu_custom_call.1} parent=1 // pred_check_branch
      %304 = sbr.rel (0) target = $region45
    $region44: #{tpu_custom_call.1} parent=1 // pred_region
      %305 = dma.done [#allocation8], 16
    $region45: #{tpu_custom_call.1} parent=1 // pred_fallthru
      _
    // Predicated region
    $region46: #{tpu_custom_call.1} parent=1 // pred_check
      _
    $region47: #{tpu_custom_call.1} parent=1 // pred_check_branch
      %307 = sbr.rel (0) target = $region49
    $region48: #{tpu_custom_call.1} parent=1 // pred_region
      %308 = dma.done [#allocation8], 16
    $region49: #{tpu_custom_call.1} parent=1 // pred_fallthru
      _
    %309 = vsyncpa [#allocation6], 1
    %310 = vsyncpa [#allocation8], 1

</llo_original>
